<compile_context>
chip_gen: v5e
topology: v5e:2x2
jax: 0.10.0
libtpu: 0.0.40
codegen_flags: <defaults>
</compile_context>

<pallas_src>
import functools

import jax
import jax.numpy as jnp
from jax.experimental import pallas as pl
from jax.experimental.pallas import tpu as pltpu


def _vae_kernel(x_ref, eps_ref, w_ref, b_ref, out_ref, *, d_in, d_lat, d_hid):
    """One batch tile of the VecVAE forward pass.

    w_ref  : (6, P_in, P_out) zero-padded stack of [fc1, fc11, fc21|fc22, fc3, fc31, fc4]
             weights, each stored (in_features, out_features).
    b_ref  : (1, 4*d_hid + 2*d_lat + d_in) lane-concatenated biases, same order.
    out_ref: (TB, d_in + 2*d_lat) slab = [recon | mu | logvar].
    """
    x = x_ref[...]
    eps = eps_ref[...]
    b = b_ref[...]

    def linear(h, idx, fan_in, fan_out, b_off):
        w = w_ref[idx, :fan_in, :fan_out]                      # static slice of packed weights
        return (jnp.dot(h, w, preferred_element_type=jnp.float32)
                + b[:, b_off:b_off + fan_out])

    # Static bias offsets: [b1, b11, b_heads(mu|logvar), b3, b31, b4]
    o_b1 = 0
    o_b11 = o_b1 + d_hid
    o_bh = o_b11 + d_hid
    o_b3 = o_bh + 2 * d_lat
    o_b31 = o_b3 + d_hid
    o_b4 = o_b31 + d_hid

    relu = lambda v: jnp.maximum(v, 0.0)

    # ---- encode ----
    h1 = relu(linear(x, 0, d_in, d_hid, o_b1))
    h2 = relu(linear(h1, 1, d_hid, d_hid, o_b11))
    heads = linear(h2, 2, d_hid, 2 * d_lat, o_bh)              # fused mu|logvar head
    mu = heads[:, :d_lat]
    logvar = heads[:, d_lat:2 * d_lat]

    # ---- reparameterize ----
    z = mu + eps * jnp.exp(0.5 * logvar)

    # ---- decode ----
    h3 = relu(linear(z, 3, d_lat, d_hid, o_b3))
    h4 = relu(linear(h3, 4, d_hid, d_hid, o_b31))
    recon = jnp.tanh(linear(h4, 5, d_hid, d_in, o_b4))

    # Single lane-contiguous output slab: [recon | mu | logvar] -> one output DMA.
    out_ref[:, 0:d_in] = recon.astype(out_ref.dtype)
    out_ref[:, d_in:d_in + d_lat] = mu.astype(out_ref.dtype)
    out_ref[:, d_in + d_lat:d_in + 2 * d_lat] = logvar.astype(out_ref.dtype)


def _round_up(a, m):
    return (a + m - 1) // m * m


def vec_vae_forward(x, eps, params, *, batch_block=256):
    """x: (B, input_space), eps: (B, latent_space).

    params: dict of (in, out) weights and (1, out) biases (PyTorch layout transposed).
    Returns (recon, mu, logvar).
    """
    B, d_in = x.shape
    d_lat = eps.shape[1]
    d_hid = params["w1"].shape[1]

    # --- pack parameters: fuse mu/logvar heads; 1 weight DMA + 1 bias DMA ---
    w_heads = jnp.concatenate([params["w21"], params["w22"]], axis=1)
    b_heads = jnp.concatenate([params["b21"], params["b22"]], axis=1)
    weights = [params["w1"], params["w11"], w_heads,
               params["w3"], params["w31"], params["w4"]]
    biases = [params["b1"], params["b11"], b_heads,
              params["b3"], params["b31"], params["b4"]]

    p_in = max(w.shape[0] for w in weights)
    p_out = max(w.shape[1] for w in weights)
    w_pack = jnp.stack(
        [jnp.pad(w, ((0, p_in - w.shape[0]), (0, p_out - w.shape[1])))
         for w in weights]).astype(jnp.float32)
    b_pack = jnp.concatenate(biases, axis=1).astype(jnp.float32)
    n_w = w_pack.shape[0]
    n_b = b_pack.shape[1]

    # --- batch tiling: tile must be a multiple of 8; pad batch to a tile multiple ---
    tb = batch_block if B > batch_block else _round_up(B, 8)
    tb = max(8, _round_up(tb, 8))
    b_pad = _round_up(B, tb)
    if b_pad != B:
        x = jnp.pad(x, ((0, b_pad - B), (0, 0)))
        eps = jnp.pad(eps, ((0, b_pad - B), (0, 0)))

    d_out = d_in + 2 * d_lat
    grid = (b_pad // tb,)

    kernel = functools.partial(_vae_kernel, d_in=d_in, d_lat=d_lat, d_hid=d_hid)

    out = pl.pallas_call(
        kernel,
        out_shape=jax.ShapeDtypeStruct((b_pad, d_out), jnp.float32),
        grid=grid,
        in_specs=[
            pl.BlockSpec((tb, d_in), lambda i: (i, 0)),             # x batch tile
            pl.BlockSpec((tb, d_lat), lambda i: (i, 0)),            # eps batch tile
            pl.BlockSpec((n_w, p_in, p_out), lambda i: (0, 0, 0)),  # packed weights (resident)
            pl.BlockSpec((1, n_b), lambda i: (0, 0)),               # packed biases (resident)
        ],
        out_specs=pl.BlockSpec((tb, d_out), lambda i: (i, 0)),      # fused output slab
        compiler_params=pltpu.CompilerParams(
            dimension_semantics=("parallel",)),                     # batch tiles independent (v7x 2 TCs)
    )(x, eps, w_pack, b_pack)

    recon = out[:B, :d_in]
    mu = out[:B, d_in:d_in + d_lat]
    logvar = out[:B, d_in + d_lat:d_in + 2 * d_lat]
    return recon, mu, logvar


def init_params(key, input_space, latent_space):
    hidden = latent_space * 2

    def linear(k, fan_in, fan_out):
        kw, kb = jax.random.split(k)
        bound = 1.0 / jnp.sqrt(fan_in)
        w = jax.random.uniform(kw, (fan_in, fan_out), jnp.float32, -bound, bound)
        b = jax.random.uniform(kb, (1, fan_out), jnp.float32, -bound, bound)
        return w, b

    keys = jax.random.split(key, 7)
    p = {}
    p["w1"], p["b1"] = linear(keys[0], input_space, hidden)
    p["w11"], p["b11"] = linear(keys[1], hidden, hidden)
    p["w21"], p["b21"] = linear(keys[2], hidden, latent_space)
    p["w22"], p["b22"] = linear(keys[3], hidden, latent_space)
    p["w3"], p["b3"] = linear(keys[4], latent_space, hidden)
    p["w31"], p["b31"] = linear(keys[5], hidden, hidden)
    p["w4"], p["b4"] = linear(keys[6], hidden, input_space)
    return p


def reference_forward(x, eps, p):
    relu = lambda v: jnp.maximum(v, 0.0)
    h1 = relu(x @ p["w1"] + p["b1"])
    h2 = relu(h1 @ p["w11"] + p["b11"])
    mu = h2 @ p["w21"] + p["b21"]
    logvar = h2 @ p["w22"] + p["b22"]
    z = mu + eps * jnp.exp(0.5 * logvar)
    h3 = relu(z @ p["w3"] + p["b3"])
    h4 = relu(h3 @ p["w31"] + p["b31"])
    return jnp.tanh(h4 @ p["w4"] + p["b4"]), mu, logvar


if __name__ == "__main__":
    INPUT_SPACE = 16
    LATENT_SPACE = 8

    key = jax.random.PRNGKey(0)
    k_params, k_x, k_eps, k_x2, k_eps2 = jax.random.split(key, 5)
    params = init_params(k_params, INPUT_SPACE, LATENT_SPACE)

    # --- small batch (module-scale example) ---
    B = 2
    x = jax.random.normal(k_x, (B, INPUT_SPACE), jnp.float32)
    eps = jax.random.normal(k_eps, (B, LATENT_SPACE), jnp.float32)
    recon, mu, logvar = vec_vae_forward(x, eps, params)
    jax.block_until_ready((recon, mu, logvar))
    r_ref, mu_ref, lv_ref = reference_forward(x, eps, params)
    assert jnp.allclose(recon, r_ref, atol=1e-5), "recon mismatch (B=2)"
    assert jnp.allclose(mu, mu_ref, atol=1e-5), "mu mismatch (B=2)"
    assert jnp.allclose(logvar, lv_ref, atol=1e-5), "logvar mismatch (B=2)"

    # --- larger, non-multiple batch to exercise the grid + padding path ---
    B2 = 300
    x2 = jax.random.normal(k_x2, (B2, INPUT_SPACE), jnp.float32)
    eps2 = jax.random.normal(k_eps2, (B2, LATENT_SPACE), jnp.float32)
    recon2, mu2, logvar2 = vec_vae_forward(x2, eps2, params, batch_block=128)
    jax.block_until_ready((recon2, mu2, logvar2))
    r2, m2, l2 = reference_forward(x2, eps2, params)
    assert jnp.allclose(recon2, r2, atol=1e-5), "recon mismatch (B=300)"
    assert jnp.allclose(mu2, m2, atol=1e-5), "mu mismatch (B=300)"
    assert jnp.allclose(logvar2, l2, atol=1e-5), "logvar mismatch (B=300)"

    print("KERNEL_OK")
</pallas_src>

<mosaic_0001>
module attributes {stable_mosaic.version = 11 : i64} {
  func.func @_vae_kernel(%arg0: i32, %arg1: memref<8x16xf32, #tpu.memory_space<vmem>>, %arg2: memref<8x8xf32, #tpu.memory_space<vmem>>, %arg3: memref<6x16x16xf32, #tpu.memory_space<vmem>>, %arg4: memref<1x96xf32, #tpu.memory_space<vmem>>, %arg5: memref<8x32xf32, #tpu.memory_space<vmem>>) attributes {dimension_semantics = [#tpu.dimension_semantics<parallel>], iteration_bounds = array<i64: 1>, scalar_prefetch = 0 : i64, scratch_operands = 0 : i64, tpu.core_type = #tpu.core_type<tc>, window_params = [{transform_indices = @transform_0, window_bounds = array<i64: 8, 16>}, {transform_indices = @transform_1, window_bounds = array<i64: 8, 8>}, {pipeline_mode = #tpu.pipeline_mode<synchronous>, transform_indices = @transform_2, window_bounds = array<i64: 6, 16, 16>}, {pipeline_mode = #tpu.pipeline_mode<synchronous>, transform_indices = @transform_3, window_bounds = array<i64: 1, 96>}, {transform_indices = @transform_4, window_bounds = array<i64: 8, 32>}]} {
    %c0 = arith.constant 0 : index
    %c0_0 = arith.constant 0 : index
    %0 = vector.load %arg1[%c0, %c0_0] : memref<8x16xf32, #tpu.memory_space<vmem>>, vector<8x16xf32>
    %c0_1 = arith.constant 0 : index
    %c0_2 = arith.constant 0 : index
    %1 = vector.load %arg2[%c0_1, %c0_2] : memref<8x8xf32, #tpu.memory_space<vmem>>, vector<8x8xf32>
    %c0_3 = arith.constant 0 : index
    %c0_4 = arith.constant 0 : index
    %2 = vector.load %arg4[%c0_3, %c0_4] : memref<1x96xf32, #tpu.memory_space<vmem>>, vector<1x96xf32>
    %c0_5 = arith.constant 0 : index
    %c0_6 = arith.constant 0 : index
    %c0_7 = arith.constant 0 : index
    %3 = vector.load %arg3[%c0_5, %c0_6, %c0_7] : memref<6x16x16xf32, #tpu.memory_space<vmem>>, vector<1x16x16xf32>
    %4 = vector.shape_cast %3 : vector<1x16x16xf32> to vector<16x16xf32>
    %cst = arith.constant dense<0.000000e+00> : vector<8x16xf32>
    %5 = tpu.matmul %0, %4, %cst {dimension_numbers = #tpu.dot_dimension_numbers<[1], [0], [0], [1], [0, 0, 1, 1], [], []>} : vector<8x16xf32>, vector<16x16xf32>, vector<8x16xf32> -> vector<8x16xf32>
    %6 = vector.extract_strided_slice %2 {offsets = [0, 0], sizes = [1, 16], strides = [1, 1]} : vector<1x96xf32> to vector<1x16xf32>
    %7 = vector.broadcast %6 : vector<1x16xf32> to vector<8x16xf32>
    %8 = arith.addf %5, %7 : vector<8x16xf32>
    %cst_8 = arith.constant 0.000000e+00 : f32
    %9 = vector.broadcast %cst_8 : f32 to vector<8x16xf32>
    %10 = arith.maximumf %8, %9 : vector<8x16xf32>
    %c1 = arith.constant 1 : index
    %c0_9 = arith.constant 0 : index
    %c0_10 = arith.constant 0 : index
    %11 = vector.load %arg3[%c1, %c0_9, %c0_10] : memref<6x16x16xf32, #tpu.memory_space<vmem>>, vector<1x16x16xf32>
    %12 = vector.shape_cast %11 : vector<1x16x16xf32> to vector<16x16xf32>
    %cst_11 = arith.constant dense<0.000000e+00> : vector<8x16xf32>
    %13 = tpu.matmul %10, %12, %cst_11 {dimension_numbers = #tpu.dot_dimension_numbers<[1], [0], [0], [1], [0, 0, 1, 1], [], []>} : vector<8x16xf32>, vector<16x16xf32>, vector<8x16xf32> -> vector<8x16xf32>
    %14 = vector.extract_strided_slice %2 {offsets = [0, 16], sizes = [1, 16], strides = [1, 1]} : vector<1x96xf32> to vector<1x16xf32>
    %15 = vector.broadcast %14 : vector<1x16xf32> to vector<8x16xf32>
    %16 = arith.addf %13, %15 : vector<8x16xf32>
    %cst_12 = arith.constant 0.000000e+00 : f32
    %17 = vector.broadcast %cst_12 : f32 to vector<8x16xf32>
    %18 = arith.maximumf %16, %17 : vector<8x16xf32>
    %c2 = arith.constant 2 : index
    %c0_13 = arith.constant 0 : index
    %c0_14 = arith.constant 0 : index
    %19 = vector.load %arg3[%c2, %c0_13, %c0_14] : memref<6x16x16xf32, #tpu.memory_space<vmem>>, vector<1x16x16xf32>
    %20 = vector.shape_cast %19 : vector<1x16x16xf32> to vector<16x16xf32>
    %cst_15 = arith.constant dense<0.000000e+00> : vector<8x16xf32>
    %21 = tpu.matmul %18, %20, %cst_15 {dimension_numbers = #tpu.dot_dimension_numbers<[1], [0], [0], [1], [0, 0, 1, 1], [], []>} : vector<8x16xf32>, vector<16x16xf32>, vector<8x16xf32> -> vector<8x16xf32>
    %22 = vector.extract_strided_slice %2 {offsets = [0, 32], sizes = [1, 16], strides = [1, 1]} : vector<1x96xf32> to vector<1x16xf32>
    %23 = vector.broadcast %22 : vector<1x16xf32> to vector<8x16xf32>
    %24 = arith.addf %21, %23 : vector<8x16xf32>
    %25 = vector.extract_strided_slice %24 {offsets = [0, 0], sizes = [8, 8], strides = [1, 1]} : vector<8x16xf32> to vector<8x8xf32>
    %26 = vector.extract_strided_slice %24 {offsets = [0, 8], sizes = [8, 8], strides = [1, 1]} : vector<8x16xf32> to vector<8x8xf32>
    %cst_16 = arith.constant 5.000000e-01 : f32
    %27 = vector.broadcast %cst_16 : f32 to vector<8x8xf32>
    %28 = arith.mulf %27, %26 : vector<8x8xf32>
    %29 = math.exp %28 : vector<8x8xf32>
    %30 = arith.mulf %1, %29 : vector<8x8xf32>
    %31 = arith.addf %25, %30 : vector<8x8xf32>
    %c3 = arith.constant 3 : index
    %c0_17 = arith.constant 0 : index
    %c0_18 = arith.constant 0 : index
    %32 = vector.load %arg3[%c3, %c0_17, %c0_18] : memref<6x16x16xf32, #tpu.memory_space<vmem>>, vector<1x8x16xf32>
    %33 = vector.shape_cast %32 : vector<1x8x16xf32> to vector<8x16xf32>
    %cst_19 = arith.constant dense<0.000000e+00> : vector<8x16xf32>
    %34 = tpu.matmul %31, %33, %cst_19 {dimension_numbers = #tpu.dot_dimension_numbers<[1], [0], [0], [1], [0, 0, 1, 1], [], []>} : vector<8x8xf32>, vector<8x16xf32>, vector<8x16xf32> -> vector<8x16xf32>
    %35 = vector.extract_strided_slice %2 {offsets = [0, 48], sizes = [1, 16], strides = [1, 1]} : vector<1x96xf32> to vector<1x16xf32>
    %36 = vector.broadcast %35 : vector<1x16xf32> to vector<8x16xf32>
    %37 = arith.addf %34, %36 : vector<8x16xf32>
    %cst_20 = arith.constant 0.000000e+00 : f32
    %38 = vector.broadcast %cst_20 : f32 to vector<8x16xf32>
    %39 = arith.maximumf %37, %38 : vector<8x16xf32>
    %c4 = arith.constant 4 : index
    %c0_21 = arith.constant 0 : index
    %c0_22 = arith.constant 0 : index
    %40 = vector.load %arg3[%c4, %c0_21, %c0_22] : memref<6x16x16xf32, #tpu.memory_space<vmem>>, vector<1x16x16xf32>
    %41 = vector.shape_cast %40 : vector<1x16x16xf32> to vector<16x16xf32>
    %cst_23 = arith.constant dense<0.000000e+00> : vector<8x16xf32>
    %42 = tpu.matmul %39, %41, %cst_23 {dimension_numbers = #tpu.dot_dimension_numbers<[1], [0], [0], [1], [0, 0, 1, 1], [], []>} : vector<8x16xf32>, vector<16x16xf32>, vector<8x16xf32> -> vector<8x16xf32>
    %43 = vector.extract_strided_slice %2 {offsets = [0, 64], sizes = [1, 16], strides = [1, 1]} : vector<1x96xf32> to vector<1x16xf32>
    %44 = vector.broadcast %43 : vector<1x16xf32> to vector<8x16xf32>
    %45 = arith.addf %42, %44 : vector<8x16xf32>
    %cst_24 = arith.constant 0.000000e+00 : f32
    %46 = vector.broadcast %cst_24 : f32 to vector<8x16xf32>
    %47 = arith.maximumf %45, %46 : vector<8x16xf32>
    %c5 = arith.constant 5 : index
    %c0_25 = arith.constant 0 : index
    %c0_26 = arith.constant 0 : index
    %48 = vector.load %arg3[%c5, %c0_25, %c0_26] : memref<6x16x16xf32, #tpu.memory_space<vmem>>, vector<1x16x16xf32>
    %49 = vector.shape_cast %48 : vector<1x16x16xf32> to vector<16x16xf32>
    %cst_27 = arith.constant dense<0.000000e+00> : vector<8x16xf32>
    %50 = tpu.matmul %47, %49, %cst_27 {dimension_numbers = #tpu.dot_dimension_numbers<[1], [0], [0], [1], [0, 0, 1, 1], [], []>} : vector<8x16xf32>, vector<16x16xf32>, vector<8x16xf32> -> vector<8x16xf32>
    %51 = vector.extract_strided_slice %2 {offsets = [0, 80], sizes = [1, 16], strides = [1, 1]} : vector<1x96xf32> to vector<1x16xf32>
    %52 = vector.broadcast %51 : vector<1x16xf32> to vector<8x16xf32>
    %53 = arith.addf %50, %52 : vector<8x16xf32>
    %54 = math.tanh %53 : vector<8x16xf32>
    %c0_28 = arith.constant 0 : index
    %c0_29 = arith.constant 0 : index
    %55 = vector.load %arg5[%c0_28, %c0_29] : memref<8x32xf32, #tpu.memory_space<vmem>>, vector<8x16xf32>
    tpu.vector_store %arg5[%c0_28, %c0_29], %54 {strides = array<i32>} : memref<8x32xf32, #tpu.memory_space<vmem>>, vector<8x16xf32>,
    %c0_30 = arith.constant 0 : index
    %c16 = arith.constant 16 : index
    %56 = vector.load %arg5[%c0_30, %c16] : memref<8x32xf32, #tpu.memory_space<vmem>>, vector<8x8xf32>
    tpu.vector_store %arg5[%c0_30, %c16], %25 {strides = array<i32>} : memref<8x32xf32, #tpu.memory_space<vmem>>, vector<8x8xf32>,
    %c0_31 = arith.constant 0 : index
    %c24 = arith.constant 24 : index
    %57 = vector.load %arg5[%c0_31, %c24] : memref<8x32xf32, #tpu.memory_space<vmem>>, vector<8x8xf32>
    tpu.vector_store %arg5[%c0_31, %c24], %26 {strides = array<i32>} : memref<8x32xf32, #tpu.memory_space<vmem>>, vector<8x8xf32>,
    return
  }
  func.func @transform_0(%arg0: i32) -> (i32, i32) {
    %c0_i32 = arith.constant 0 : i32
    %c0_i32_0 = arith.constant 0 : i32
    return %arg0, %c0_i32 : i32, i32
  }
  func.func @transform_1(%arg0: i32) -> (i32, i32) {
    %c0_i32 = arith.constant 0 : i32
    %c0_i32_0 = arith.constant 0 : i32
    return %arg0, %c0_i32 : i32, i32
  }
  func.func @transform_2(%arg0: i32) -> (i32, i32, i32) {
    %c0_i32 = arith.constant 0 : i32
    %c0_i32_0 = arith.constant 0 : i32
    %c0_i32_1 = arith.constant 0 : i32
    %c0_i32_2 = arith.constant 0 : i32
    return %c0_i32, %c0_i32_0, %c0_i32_1 : i32, i32, i32
  }
  func.func @transform_3(%arg0: i32) -> (i32, i32) {
    %c0_i32 = arith.constant 0 : i32
    %c0_i32_0 = arith.constant 0 : i32
    %c0_i32_1 = arith.constant 0 : i32
    return %c0_i32, %c0_i32_0 : i32, i32
  }
  func.func @transform_4(%arg0: i32) -> (i32, i32) {
    %c0_i32 = arith.constant 0 : i32
    %c0_i32_0 = arith.constant 0 : i32
    return %arg0, %c0_i32 : i32, i32
  }
}

</mosaic_0001>

<llo_original>
// kernel: tpu_custom_call.1
$region0: #{tpu_custom_call.1}
  #allocation0 [shape = 'u32[]', space=smem, size = 0x4, offset = 0x4, fixed_abs, tag = 'smem constant byte address 0x4 - core index']
  #allocation1 [shape = 'u32[72,128]{1,0:T(1,128)}', space=vmem, size = 0x9000, scoped, tag = 'internal scratch']
  %s0 = inlined_call_operand.hbm [shape: f32[8,16], index: 0, kind: input, shape index: {}]
  %s1 = inlined_call_operand.hbm [shape: f32[8,8], index: 1, kind: input, shape index: {}]
  %s2 = inlined_call_operand.hbm [shape: f32[6,16,16], index: 2, kind: input, shape index: {}]
  %s3 = inlined_call_operand.vmem [shape: f32[1,96], index: 3, kind: input, shape index: {}]
  %s4 = inlined_call_operand.hbm [shape: f32[8,32], index: 4, kind: output, shape index: {}]
  %s5 = sld [smem:[#allocation0]]
  $region38: #{tpu_custom_call.1} parent=0
    _
  %s7 = ssub.s32 1, %s5
  %s8 = scalar_select 0, %s7, %s5
  $region1: #{tpu_custom_call.1} parent=0
    #allocation2 [shape = 'u8[4096]{0}', space=vmem, size = 0x1000, scoped, tag = 'input window, operand 0, single buffered']
    #allocation3 [shape = 's32[1]{0}', space=sflag, size = 0x4, scoped, tag = 'scoped memory for tpu_custom_call.1']
    #allocation4 [shape = 's32[1]{0}', space=sflag, size = 0x4, scoped, tag = 'scoped memory for tpu_custom_call.1']
    #allocation5 [shape = 'u8[4096]{0}', space=vmem, size = 0x1000, scoped, tag = 'input window, operand 1, single buffered']
    #allocation6 [shape = 's32[1]{0}', space=sflag, size = 0x4, scoped, tag = 'scoped memory for tpu_custom_call.1']
    #allocation7 [shape = 'u8[49152]{0}', space=vmem, size = 0xc000, scoped, tag = 'input window, operand 2, single buffered']
    #allocation8 [shape = 'u8[4096]{0}', space=vmem, size = 0x1000, scoped, tag = 'output window, operand 0, single buffered']
    %9 = vsyncpa [#allocation3], 0
    %10 = vsyncpa [#allocation6], 0
    %11 = vsyncpa [#allocation4], 0
    // Predicated region
    $region2: #{tpu_custom_call.1} parent=1 // pred_check
      _
    $region3: #{tpu_custom_call.1} parent=1 // pred_check_branch
      %13 = sbr.rel (0) target = $region5
    $region4: #{tpu_custom_call.1} parent=1 // pred_region
      %15 = vsyncadd [#allocation3], 0
      %s17 = sshll.u32 %s0, 4
      %s18 = int_to_ptr.hbm [resolvable:$true] %s17
      %s19 = sshll.u32 [#allocation2], 4
      %s20 = int_to_ptr.vmem [resolvable:$true] %s19
      %22 = dma.hbm_to_vmem [thread:$0]  %s18, 128, %s20, [#allocation3]
    $region5: #{tpu_custom_call.1} parent=1 // pred_fallthru
      _
    // Predicated region
    $region6: #{tpu_custom_call.1} parent=1 // pred_check
      _
    $region7: #{tpu_custom_call.1} parent=1 // pred_check_branch
      %24 = sbr.rel (0) target = $region9
    $region8: #{tpu_custom_call.1} parent=1 // pred_region
      %26 = vsyncadd [#allocation6], 0
      %s28 = sshll.u32 %s1, 4
      %s29 = int_to_ptr.hbm [resolvable:$true] %s28
      %s30 = sshll.u32 [#allocation5], 4
      %s31 = int_to_ptr.vmem [resolvable:$true] %s30
      %33 = dma.hbm_to_vmem [thread:$0]  %s29, 128, %s31, [#allocation6]
    $region9: #{tpu_custom_call.1} parent=1 // pred_fallthru
      _
    // Predicated region
    $region10: #{tpu_custom_call.1} parent=1 // pred_check
      _
    $region11: #{tpu_custom_call.1} parent=1 // pred_check_branch
      %35 = sbr.rel (0) target = $region13
    $region12: #{tpu_custom_call.1} parent=1 // pred_region
      %37 = vsyncadd [#allocation6], 0
      %s38 = sshll.u32 %s2, 4
      %s39 = int_to_ptr.hbm [resolvable:$true] %s38
      %s40 = sshll.u32 [#allocation7], 4
      %s41 = int_to_ptr.vmem [resolvable:$true] %s40
      %46 = dma.hbm_to_vmem [thread:$0]  %s39, 1536, %s41, [#allocation6], 128, 128, 8
    $region13: #{tpu_custom_call.1} parent=1 // pred_fallthru
      _
    // Predicated region
    $region14: #{tpu_custom_call.1} parent=1 // pred_check
      _
    $region15: #{tpu_custom_call.1} parent=1 // pred_check_branch
      %48 = sbr.rel (0) target = $region17
    $region16: #{tpu_custom_call.1} parent=1 // pred_region
      _
    $region17: #{tpu_custom_call.1} parent=1 // pred_fallthru
      _
    // Predicated region
    $region18: #{tpu_custom_call.1} parent=1 // pred_check
      _
    $region19: #{tpu_custom_call.1} parent=1 // pred_check_branch
      %50 = sbr.rel (0) target = $region21
    $region20: #{tpu_custom_call.1} parent=1 // pred_region
      %52 = dma.done [#allocation3], 128
    $region21: #{tpu_custom_call.1} parent=1 // pred_fallthru
      _
    // Predicated region
    $region22: #{tpu_custom_call.1} parent=1 // pred_check
      _
    $region23: #{tpu_custom_call.1} parent=1 // pred_check_branch
      %54 = sbr.rel (0) target = $region25
    $region24: #{tpu_custom_call.1} parent=1 // pred_region
      %56 = dma.done [#allocation6], 128
    $region25: #{tpu_custom_call.1} parent=1 // pred_fallthru
      _
    // Predicated region
    $region26: #{tpu_custom_call.1} parent=1 // pred_check
      _
    $region27: #{tpu_custom_call.1} parent=1 // pred_check_branch
      %58 = sbr.rel (0) target = $region29
    $region28: #{tpu_custom_call.1} parent=1 // pred_region
      %60 = dma.done [#allocation6], 1536
    $region29: #{tpu_custom_call.1} parent=1 // pred_fallthru
      _
    %v61 = vld [vmem:[#allocation2] sm:$0xff]
    %v62 = vld [vmem:[#allocation5] sm:$0xff]
    %v63 = vld [vmem:[%s3] sm:$0x1]
    %v64 = vld [vmem:[#allocation7] sm:$0xff]
    %v65 = vld [vmem:[#allocation7 + $0x8] sm:$0xff]
    %v67 = vperm.slane %v63, 0
    %vm69 = vcmask 130048
    %v71 = vsel %vm69, %v61, 0
    %73 = vmatpush.msra.mxu0 0.0
    %74 = vmatpush.msra.mxu0 0.0
    %75 = vmatpush.msra.mxu0 0.0
    %76 = vmatpush.msra.mxu0 0.0
    %77 = vmatpush.msra.mxu0 0.0
    %78 = vmatpush.msra.mxu0 0.0
    %79 = vmatpush.msra.mxu0 0.0
    %80 = vmatpush.msra.mxu0 0.0
    %81 = vmatpush.msra.mxu0 0.0
    %82 = vmatpush.msra.mxu0 0.0
    %83 = vmatpush.msra.mxu0 0.0
    %84 = vmatpush.msra.mxu0 0.0
    %85 = vmatpush.msra.mxu0 0.0
    %86 = vmatpush.msra.mxu0 0.0
    %87 = vmatpush.msra.mxu0 %v65
    %88 = vmatpush.msra.mxu0 %v64
    %89 = vmatmul.f32.gmra.mxu0 %v71
    %v90 = vpop.f32.mrf.mxu0
    %v91 = vadd.f32 %v67, %v90
    %92 = vdwg.mxu0
    %v93 = vmax.f32 %v91, 0.0
    %s94 = scalar_lea.vmem [#allocation7], 16
    %v95 = vld [vmem:[%s94] sm:$0xff]
    %v96 = vld [vmem:[%s94 + $0x8] sm:$0xff]
    %97 = vrot.lane.b32.xlu0 %v67, 112
    %v98 = vpop.permute.xlu0 %97
    %v101 = vsel %vm69, %v93, 0
    %103 = vmatpush.msra.mxu0 0.0
    %104 = vmatpush.msra.mxu0 0.0
    %105 = vmatpush.msra.mxu0 0.0
    %106 = vmatpush.msra.mxu0 0.0
    %107 = vmatpush.msra.mxu0 0.0
    %108 = vmatpush.msra.mxu0 0.0
    %109 = vmatpush.msra.mxu0 0.0
    %110 = vmatpush.msra.mxu0 0.0
    %111 = vmatpush.msra.mxu0 0.0
    %112 = vmatpush.msra.mxu0 0.0
    %113 = vmatpush.msra.mxu0 0.0
    %114 = vmatpush.msra.mxu0 0.0
    %115 = vmatpush.msra.mxu0 0.0
    %116 = vmatpush.msra.mxu0 0.0
    %117 = vmatpush.msra.mxu0 %v96
    %118 = vmatpush.msra.mxu0 %v95
    %119 = vmatmul.f32.gmra.mxu0 %v101
    %v120 = vpop.f32.mrf.mxu0
    %v121 = vadd.f32 %v98, %v120
    %122 = vdwg.mxu0
    %v123 = vmax.f32 %v121, 0.0
    %s124 = scalar_lea.vmem [#allocation7], 32
    %v125 = vld [vmem:[%s124] sm:$0xff]
    %v126 = vld [vmem:[%s124 + $0x8] sm:$0xff]
    %127 = vrot.lane.b32.xlu0 %v67, 96
    %v128 = vpop.permute.xlu0 %127
    %v131 = vsel %vm69, %v123, 0
    %133 = vmatpush.msra.mxu0 0.0
    %134 = vmatpush.msra.mxu0 0.0
    %135 = vmatpush.msra.mxu0 0.0
    %136 = vmatpush.msra.mxu0 0.0
    %137 = vmatpush.msra.mxu0 0.0
    %138 = vmatpush.msra.mxu0 0.0
    %139 = vmatpush.msra.mxu0 0.0
    %140 = vmatpush.msra.mxu0 0.0
    %141 = vmatpush.msra.mxu0 0.0
    %142 = vmatpush.msra.mxu0 0.0
    %143 = vmatpush.msra.mxu0 0.0
    %144 = vmatpush.msra.mxu0 0.0
    %145 = vmatpush.msra.mxu0 0.0
    %146 = vmatpush.msra.mxu0 0.0
    %147 = vmatpush.msra.mxu0 %v126
    %148 = vmatpush.msra.mxu0 %v125
    %149 = vmatmul.f32.gmra.mxu0 %v131
    %v150 = vpop.f32.mrf.mxu0
    %v151 = vadd.f32 %v128, %v150
    %152 = vdwg.mxu0
    %v153 = vmul.f32 %v151, 0.5
    %v154 = vmul.f32 %v153, 1.442695
    %v155 = vpow.pop %v154
    %157 = vrot.lane.b32.xlu0 %v155, 120
    %v158 = vpop.permute.xlu0 %157
    %v160 = vmul.f32 %v62, %v158
    %v161 = vadd.f32 %v151, %v160
    %s162 = scalar_lea.vmem [#allocation7], 48
    %v163 = vld [vmem:[%s162] sm:$0xff]
    %164 = vrot.lane.b32.xlu0 %v67, 80
    %v165 = vpop.permute.xlu0 %164
    %vm167 = vcmask 64512
    %v169 = vsel %vm167, %v161, 0
    %171 = vmatpush.msra.mxu0 0.0
    %172 = vmatpush.msra.mxu0 0.0
    %173 = vmatpush.msra.mxu0 0.0
    %174 = vmatpush.msra.mxu0 0.0
    %175 = vmatpush.msra.mxu0 0.0
    %176 = vmatpush.msra.mxu0 0.0
    %177 = vmatpush.msra.mxu0 0.0
    %178 = vmatpush.msra.mxu0 0.0
    %179 = vmatpush.msra.mxu0 0.0
    %180 = vmatpush.msra.mxu0 0.0
    %181 = vmatpush.msra.mxu0 0.0
    %182 = vmatpush.msra.mxu0 0.0
    %183 = vmatpush.msra.mxu0 0.0
    %184 = vmatpush.msra.mxu0 0.0
    %185 = vmatpush.msra.mxu0 0.0
    %186 = vmatpush.msra.mxu0 %v163
    %187 = vmatmul.f32.gmra.mxu0 %v169
    %v188 = vpop.f32.mrf.mxu0
    %v189 = vadd.f32 %v165, %v188
    %190 = vdwg.mxu0
    %v191 = vmax.f32 %v189, 0.0
    %s192 = scalar_lea.vmem [#allocation7], 64
    %v193 = vld [vmem:[%s192] sm:$0xff]
    %v194 = vld [vmem:[%s192 + $0x8] sm:$0xff]
    %195 = vrot.lane.b32.xlu0 %v67, 64
    %v196 = vpop.permute.xlu0 %195
    %v199 = vsel %vm69, %v191, 0
    %201 = vmatpush.msra.mxu0 0.0
    %202 = vmatpush.msra.mxu0 0.0
    %203 = vmatpush.msra.mxu0 0.0
    %204 = vmatpush.msra.mxu0 0.0
    %205 = vmatpush.msra.mxu0 0.0
    %206 = vmatpush.msra.mxu0 0.0
    %207 = vmatpush.msra.mxu0 0.0
    %208 = vmatpush.msra.mxu0 0.0
    %209 = vmatpush.msra.mxu0 0.0
    %210 = vmatpush.msra.mxu0 0.0
    %211 = vmatpush.msra.mxu0 0.0
    %212 = vmatpush.msra.mxu0 0.0
    %213 = vmatpush.msra.mxu0 0.0
    %214 = vmatpush.msra.mxu0 0.0
    %215 = vmatpush.msra.mxu0 %v194
    %216 = vmatpush.msra.mxu0 %v193
    %217 = vmatmul.f32.gmra.mxu0 %v199
    %v218 = vpop.f32.mrf.mxu0
    %v219 = vadd.f32 %v196, %v218
    %220 = vdwg.mxu0
    %v221 = vmax.f32 %v219, 0.0
    %s222 = scalar_lea.vmem [#allocation7], 80
    %v223 = vld [vmem:[%s222] sm:$0xff]
    %v224 = vld [vmem:[%s222 + $0x8] sm:$0xff]
    %225 = vrot.lane.b32.xlu0 %v67, 48
    %v226 = vpop.permute.xlu0 %225
    %v229 = vsel %vm69, %v221, 0
    %231 = vmatpush.msra.mxu0 0.0
    %232 = vmatpush.msra.mxu0 0.0
    %233 = vmatpush.msra.mxu0 0.0
    %234 = vmatpush.msra.mxu0 0.0
    %235 = vmatpush.msra.mxu0 0.0
    %236 = vmatpush.msra.mxu0 0.0
    %237 = vmatpush.msra.mxu0 0.0
    %238 = vmatpush.msra.mxu0 0.0
    %239 = vmatpush.msra.mxu0 0.0
    %240 = vmatpush.msra.mxu0 0.0
    %241 = vmatpush.msra.mxu0 0.0
    %242 = vmatpush.msra.mxu0 0.0
    %243 = vmatpush.msra.mxu0 0.0
    %244 = vmatpush.msra.mxu0 0.0
    %245 = vmatpush.msra.mxu0 %v224
    %246 = vmatpush.msra.mxu0 %v223
    %247 = vmatmul.f32.gmra.mxu0 %v229
    %v248 = vpop.f32.mrf.mxu0
    %v249 = vadd.f32 %v226, %v248
    %250 = vdwg.mxu0
    %v251 = vtanh.pop %v249
    %252 = vst.msk [vmem:[#allocation8] sm:$0xff] %vm69, %v251
    %254 = vrot.lane.b32.xlu0 %v151, 16
    %v255 = vpop.permute.xlu0 %254
    %vm257 = vcmask 195712
    %258 = vst.msk [vmem:[#allocation8] sm:$0xff] %vm257, %v255
    %vm259 = vcmask 261312
    %260 = vst.msk [vmem:[#allocation8] sm:$0xff] %vm259, %v255
    // Predicated region
    $region30: #{tpu_custom_call.1} parent=1 // pred_check
      _
    $region31: #{tpu_custom_call.1} parent=1 // pred_check_branch
      %262 = sbr.rel (0) target = $region33
    $region32: #{tpu_custom_call.1} parent=1 // pred_region
      %264 = vsyncadd [#allocation4], 0
      %s266 = sshll.u32 [#allocation8], 4
      %s267 = int_to_ptr.vmem [resolvable:$true] %s266
      %s268 = sshll.u32 %s4, 4
      %s269 = int_to_ptr.hbm [resolvable:$true] %s268
      %271 = dma.vmem_to_hbm [thread:$0]  %s267, 128, %s269, [#allocation4]
    $region33: #{tpu_custom_call.1} parent=1 // pred_fallthru
      _
    // Predicated region
    $region34: #{tpu_custom_call.1} parent=1 // pred_check
      _
    $region35: #{tpu_custom_call.1} parent=1 // pred_check_branch
      %273 = sbr.rel (0) target = $region37
    $region36: #{tpu_custom_call.1} parent=1 // pred_region
      %275 = dma.done [#allocation4], 128
    $region37: #{tpu_custom_call.1} parent=1 // pred_fallthru
      _
    %276 = vsyncpa [#allocation3], 1
    %277 = vsyncpa [#allocation6], 1
    %278 = vsyncpa [#allocation4], 1

</llo_original>
